<compile_context>
chip_gen: v7x
topology: tpu7x:2x2x1
jax: 0.10.0
libtpu: 0.0.40
codegen_flags: <defaults>
</compile_context>

<pallas_src>
import jax
import jax.numpy as jnp
from jax.experimental import pallas as pl
from jax.experimental.pallas import tpu as pltpu

IN_FEATS = 143
OUT_FEATS = 16


def gcn_kernel(x_ref, w_ref, o_ref):
    # x_ref: (tile_n, in_feats)    bf16 (compute dtype), VMEM
    # w_ref: (out_feats, in_feats) bf16 (nn.Linear layout, VMEM-resident)
    # o_ref: (tile_n, out_feats)   f32, VMEM
    # Contract feature dims (x dim 1 with w dim 1) -> x @ W.T, f32 accumulate.
    h = jax.lax.dot_general(
        x_ref[...],
        w_ref[...],
        dimension_numbers=(((1,), (1,)), ((), ())),
        preferred_element_type=jnp.float32,
    )
    o_ref[...] = jnp.maximum(h, 0.0).astype(o_ref.dtype)


def net1_forward(features, weight, *, tile_n=4096, compute_dtype=jnp.bfloat16):
    """features: (num_nodes, 143); weight: (16, 143) (nn.Linear layout).

    Returns relu(features @ weight.T) in float32.
    """
    num_nodes, in_feats = features.shape
    out_feats = weight.shape[0]
    assert weight.shape == (out_feats, in_feats)
    assert tile_n % 8 == 0, "node tile must be sublane (8) aligned"

    # bf16 inputs halve the dominant HBM read traffic (features are K=143 wide);
    # accumulation and ReLU stay in f32.
    x = features.astype(compute_dtype)
    w = weight.astype(compute_dtype)

    if num_nodes <= tile_n:
        # Single full-extent block (block dim == array dim is always legal,
        # even for non-8-aligned tiny node counts like N = 10).
        tile = num_nodes
    else:
        tile = tile_n
    grid = (pl.cdiv(num_nodes, tile),)

    bytes_accessed = (
        num_nodes * in_feats * x.dtype.itemsize        # feature reads (dominant)
        + out_feats * in_feats * w.dtype.itemsize      # weight (resident, tiny)
        + num_nodes * out_feats * 4                    # f32 output writes
    )

    return pl.pallas_call(
        gcn_kernel,
        out_shape=jax.ShapeDtypeStruct((num_nodes, out_feats), jnp.float32),
        grid=grid,
        in_specs=[
            # Node-tiled features: one (tile, in_feats) block per grid step.
            pl.BlockSpec((tile, in_feats), lambda i: (i, 0)),
            # Weight: same block every step -> stays resident in VMEM.
            pl.BlockSpec((out_feats, in_feats), lambda i: (0, 0)),
        ],
        out_specs=pl.BlockSpec((tile, out_feats), lambda i: (i, 0)),
        compiler_params=pltpu.CompilerParams(
            # Node tiles are independent -> shard across TensorCores (v7x).
            dimension_semantics=("parallel",),
            # Headroom for large tiles (safe on v5e/v6e/v7x scoped budgets).
            vmem_limit_bytes=32 * 1024 * 1024,
        ),
        cost_estimate=pl.CostEstimate(
            flops=2 * num_nodes * in_feats * out_feats,
            transcendentals=0,
            bytes_accessed=bytes_accessed,
        ),
    )(x, w)


def reference_forward(features, weight, compute_dtype=jnp.bfloat16):
    # Same bf16 input rounding as the kernel, f32 math -> tight comparison.
    x = features.astype(compute_dtype).astype(jnp.float32)
    w = weight.astype(compute_dtype).astype(jnp.float32)
    return jnp.maximum(x @ w.T, 0.0)


if __name__ == "__main__":
    key = jax.random.PRNGKey(0)
    k_feat, k_w = jax.random.split(key)

    # Deterministic stand-in for nn.Linear(143, 16, bias=False).weight.
    bound = 1.0 / (IN_FEATS ** 0.5)
    weight = jax.random.uniform(
        k_w, (OUT_FEATS, IN_FEATS), dtype=jnp.float32, minval=-bound, maxval=bound
    )

    # Case 1: N = 10 nodes, as in the original script (single full block).
    num_nodes = 10
    features = jax.random.normal(k_feat, (num_nodes, IN_FEATS), dtype=jnp.float32)
    out = jax.block_until_ready(net1_forward(features, weight))
    ref = reference_forward(features, weight)
    assert out.shape == (num_nodes, OUT_FEATS)
    assert jnp.allclose(out, ref, atol=1e-3, rtol=1e-3)

    # Case 2: multi-tile grid path (node count not a multiple of the tile),
    # exercising pipelined DMA + partial trailing block at a small scale.
    num_nodes2 = 1000
    features2 = jax.random.normal(k_feat, (num_nodes2, IN_FEATS), dtype=jnp.float32)
    out2 = jax.block_until_ready(net1_forward(features2, weight, tile_n=256))
    ref2 = reference_forward(features2, weight)
    assert out2.shape == (num_nodes2, OUT_FEATS)
    assert jnp.allclose(out2, ref2, atol=1e-3, rtol=1e-3)

    print("KERNEL_OK")
</pallas_src>

<mosaic_0001>
module attributes {stable_mosaic.version = 11 : i64} {
  func.func @gcn_kernel(%arg0: i32, %arg1: memref<10x143xbf16, #tpu.memory_space<vmem>>, %arg2: memref<16x143xbf16, #tpu.memory_space<vmem>>, %arg3: memref<10x16xf32, #tpu.memory_space<vmem>>) attributes {dimension_semantics = [#tpu.dimension_semantics<parallel>], iteration_bounds = array<i64: 1>, scalar_prefetch = 0 : i64, scratch_operands = 0 : i64, tpu.core_type = #tpu.core_type<tc>, window_params = [{transform_indices = @transform_0, window_bounds = array<i64: 10, 143>}, {pipeline_mode = #tpu.pipeline_mode<synchronous>, transform_indices = @transform_1, window_bounds = array<i64: 16, 143>}, {transform_indices = @transform_2, window_bounds = array<i64: 10, 16>}]} {
    %c0 = arith.constant 0 : index
    %c0_0 = arith.constant 0 : index
    %0 = vector.load %arg1[%c0, %c0_0] : memref<10x143xbf16, #tpu.memory_space<vmem>>, vector<10x143xbf16>
    %c0_1 = arith.constant 0 : index
    %c0_2 = arith.constant 0 : index
    %1 = vector.load %arg2[%c0_1, %c0_2] : memref<16x143xbf16, #tpu.memory_space<vmem>>, vector<16x143xbf16>
    %cst = arith.constant dense<0.000000e+00> : vector<10x16xf32>
    %2 = tpu.matmul %0, %1, %cst {dimension_numbers = #tpu.dot_dimension_numbers<[1], [1], [0], [0], [0, 0, 1, 0], [], []>} : vector<10x143xbf16>, vector<16x143xbf16>, vector<10x16xf32> -> vector<10x16xf32>
    %cst_3 = arith.constant 0.000000e+00 : f32
    %3 = vector.broadcast %cst_3 : f32 to vector<10x16xf32>
    %4 = arith.maximumf %2, %3 : vector<10x16xf32>
    %c0_4 = arith.constant 0 : index
    %c0_5 = arith.constant 0 : index
    %5 = vector.load %arg3[%c0_4, %c0_5] : memref<10x16xf32, #tpu.memory_space<vmem>>, vector<10x16xf32>
    tpu.vector_store %arg3[%c0_4, %c0_5], %4 {strides = array<i32>} : memref<10x16xf32, #tpu.memory_space<vmem>>, vector<10x16xf32>,
    return
  }
  func.func @transform_0(%arg0: i32) -> (i32, i32) {
    %c0_i32 = arith.constant 0 : i32
    %c0_i32_0 = arith.constant 0 : i32
    return %arg0, %c0_i32 : i32, i32
  }
  func.func @transform_1(%arg0: i32) -> (i32, i32) {
    %c0_i32 = arith.constant 0 : i32
    %c0_i32_0 = arith.constant 0 : i32
    %c0_i32_1 = arith.constant 0 : i32
    return %c0_i32, %c0_i32_0 : i32, i32
  }
  func.func @transform_2(%arg0: i32) -> (i32, i32) {
    %c0_i32 = arith.constant 0 : i32
    %c0_i32_0 = arith.constant 0 : i32
    return %arg0, %c0_i32 : i32, i32
  }
}

</mosaic_0001>

<llo_original>
// kernel: tpu_custom_call.1
$region0: #{tpu_custom_call.1}
  #allocation0 [shape = 'u32[]', space=smem, size = 0x4, offset = 0x4, fixed_abs, tag = 'smem constant byte address 0x4 - core index']
  #allocation1 [shape = 'u32[144,128]{1,0:T(1,128)}', space=vmem, size = 0x12000, scoped, tag = 'internal scratch']
  %s0 = inlined_call_operand.hbm [shape: bf16[10,143], index: 0, kind: input, shape index: {}]
  %s1 = inlined_call_operand.hbm [shape: bf16[16,143], index: 1, kind: input, shape index: {}]
  %s2 = inlined_call_operand.hbm [shape: f32[10,16], index: 2, kind: output, shape index: {}]
  %s3 = sld [smem:[#allocation0]]
  $region26: #{tpu_custom_call.1} parent=0
    _
  %s5 = ssub.s32 1, %s3
  %s6 = scalar_select 0, %s5, %s3
  $region1: #{tpu_custom_call.1} parent=0
    #allocation2 [shape = 'u8[8192]{0}', space=vmem, size = 0x2000, scoped, tag = 'input window, operand 0, single buffered']
    #allocation3 [shape = 's32[1]{0}', space=sflag, size = 0x4, scoped, tag = 'scoped memory for tpu_custom_call.1']
    #allocation4 [shape = 's32[1]{0}', space=sflag, size = 0x4, scoped, tag = 'scoped memory for tpu_custom_call.1']
    #allocation5 [shape = 'u8[8192]{0}', space=vmem, size = 0x2000, scoped, tag = 'input window, operand 1, single buffered']
    #allocation6 [shape = 's32[1]{0}', space=sflag, size = 0x4, scoped, tag = 'scoped memory for tpu_custom_call.1']
    #allocation7 [shape = 'u8[8192]{0}', space=vmem, size = 0x2000, scoped, tag = 'output window, operand 0, single buffered']
    %7 = vsyncpa [#allocation3], 0
    %8 = vsyncpa [#allocation6], 0
    %9 = vsyncpa [#allocation4], 0
    // Predicated region
    $region2: #{tpu_custom_call.1} parent=1 // pred_check
      _
    $region3: #{tpu_custom_call.1} parent=1 // pred_check_branch
      %11 = sbr.rel (0) target = $region5
    $region4: #{tpu_custom_call.1} parent=1 // pred_region
      %s13 = ssub.s32 256, 256
      %14 = vsyncadd [#allocation3], %s13
      %s15 = sshll.u32 [#allocation2], 4
      %s16 = int_to_ptr.vmem [resolvable:$true] %s15
      %21 = dma.hbm_to_vmem [thread:$0]  %s0, 256, %s16, [#allocation3], 128, 128, 8
    $region5: #{tpu_custom_call.1} parent=1 // pred_fallthru
      _
    // Predicated region
    $region6: #{tpu_custom_call.1} parent=1 // pred_check
      _
    $region7: #{tpu_custom_call.1} parent=1 // pred_check_branch
      %23 = sbr.rel (0) target = $region9
    $region8: #{tpu_custom_call.1} parent=1 // pred_region
      %s25 = ssub.s32 256, 256
      %26 = vsyncadd [#allocation6], %s25
      %s27 = sshll.u32 [#allocation5], 4
      %s28 = int_to_ptr.vmem [resolvable:$true] %s27
      %33 = dma.hbm_to_vmem [thread:$0]  %s1, 256, %s28, [#allocation6], 128, 128, 8
    $region9: #{tpu_custom_call.1} parent=1 // pred_fallthru
      _
    // Predicated region
    $region10: #{tpu_custom_call.1} parent=1 // pred_check
      _
    $region11: #{tpu_custom_call.1} parent=1 // pred_check_branch
      %35 = sbr.rel (0) target = $region13
    $region12: #{tpu_custom_call.1} parent=1 // pred_region
      %36 = dma.done [#allocation3], 256
    $region13: #{tpu_custom_call.1} parent=1 // pred_fallthru
      _
    // Predicated region
    $region14: #{tpu_custom_call.1} parent=1 // pred_check
      _
    $region15: #{tpu_custom_call.1} parent=1 // pred_check_branch
      %38 = sbr.rel (0) target = $region17
    $region16: #{tpu_custom_call.1} parent=1 // pred_region
      %39 = dma.done [#allocation6], 256
    $region17: #{tpu_custom_call.1} parent=1 // pred_fallthru
      _
    %v41 = vld [vmem:[#allocation2] sm:$0xff]
    %v42 = vld [vmem:[#allocation2 + $0x8] sm:$0x11]
    %v43 = vld [vmem:[#allocation5] sm:$0xff]
    %v44 = vld [vmem:[#allocation5 + $0x8] sm:$0xff]
    %v47 = vunpack.c.l.b16 %v41
    %v48 = vunpack.c.h.b16 %v41
    %v49 = vunpack.c.l.b16 %v42
    %v50 = vunpack.c.h.b16 %v42
    %v51 = vpack.c.b16 %v49, %v47
    %v52 = vpack.c.b16 %v50, %v48
    %v56 = vunpack.c.l.b16 %v43
    %v57 = vunpack.c.h.b16 %v43
    %v58 = vunpack.c.l.b16 %v44
    %v59 = vunpack.c.h.b16 %v44
    %v60 = vpack.c.b16 %v58, %v56
    %v61 = vpack.c.b16 %v59, %v57
    %vm63 = vcmask 121856
    %v65 = vsel %vm63, %v52, 0
    %v68 = vsel %vm63, %v61, 0
    %70 = vmatprep.subr.bf16.mxu0 %v68
    %71 = vmatpush1.bf16.xpose.msra.mxu0 %v60
    %72 = vmatprep.subr.bf16.mxu0 0
    %73 = vmatpush1.bf16.xpose.msra.mxu0 0
    %74 = vmatprep.subr.bf16.mxu0 0
    %75 = vmatpush1.bf16.xpose.msra.mxu0 0
    %76 = vmatprep.subr.bf16.mxu0 0
    %77 = vmatpush1.bf16.xpose.msra.mxu0 0
    %78 = vmatprep.subr.bf16.mxu0 0
    %79 = vmatpush1.bf16.xpose.msra.mxu0 0
    %80 = vmatprep.subr.bf16.mxu0 0
    %81 = vmatpush1.bf16.xpose.msra.mxu0 0
    %82 = vmatprep.subr.bf16.mxu0 0
    %83 = vmatpush1.bf16.xpose.msra.mxu0 0
    %84 = vmatprep.subr.bf16.mxu0 0
    %85 = vmatpush1.bf16.xpose.msra.mxu0 0
    %86 = vmatprep.subr.bf16.mxu0 0
    %87 = vmatpush1.bf16.xpose.msra.mxu0 0
    %88 = vmatprep.subr.bf16.mxu0 0
    %89 = vmatpush1.bf16.xpose.msra.mxu0 0
    %90 = vmatprep.subr.bf16.mxu0 0
    %91 = vmatpush1.bf16.xpose.msra.mxu0 0
    %92 = vmatprep.subr.bf16.mxu0 0
    %93 = vmatpush1.bf16.xpose.msra.mxu0 0
    %94 = vmatprep.subr.bf16.mxu0 0
    %95 = vmatpush1.bf16.xpose.msra.mxu0 0
    %96 = vmatprep.subr.bf16.mxu0 0
    %97 = vmatpush1.bf16.xpose.msra.mxu0 0
    %98 = vmatprep.subr.bf16.mxu0 0
    %99 = vmatpush1.bf16.xpose.msra.mxu0 0
    %100 = vmatprep.subr.bf16.mxu0 0
    %101 = vmatpush1.bf16.xpose.msra.mxu0 0
    %102 = vmatprep.mubr.bf16.mxu0 %v65
    %103 = vmatmul.mubr.bf16.gmra.mrb[0].mxu0 %v51
    %v104 = vpop.f32.mrb[0].mxu0
    %v105 = vadd.f32 0.0, %v104
    %v106 = vpop.f32.mrb[0].mxu0
    %v107 = vpop.f32.mrb[0].mxu0
    %v108 = vadd.f32 0.0, %v107
    %v109 = vpop.f32.mrb[0].mxu0
    %110 = vdwg.mxu0
    %v111 = vmax.f32 %v105, 0.0
    %v112 = vmax.f32 %v108, 0.0
    %vm113 = vcmask 130048
    %114 = vst.msk [vmem:[#allocation7] sm:$0xff] %vm113, %v111
    %vm115 = vcmask 123904
    %116 = vst.msk [vmem:[#allocation7 + $0x8] sm:$0x3] %vm115, %v112
    // Predicated region
    $region18: #{tpu_custom_call.1} parent=1 // pred_check
      _
    $region19: #{tpu_custom_call.1} parent=1 // pred_check_branch
      %118 = sbr.rel (0) target = $region21
    $region20: #{tpu_custom_call.1} parent=1 // pred_region
      %s120 = ssub.s32 256, 256
      %121 = vsyncadd [#allocation4], %s120
      %s122 = sshll.u32 [#allocation7], 4
      %s123 = int_to_ptr.vmem [resolvable:$true] %s122
      %128 = dma.vmem_to_hbm [thread:$0]  %s123, 256, %s2, [#allocation4], 128, 128, 8
    $region21: #{tpu_custom_call.1} parent=1 // pred_fallthru
      _
    // Predicated region
    $region22: #{tpu_custom_call.1} parent=1 // pred_check
      _
    $region23: #{tpu_custom_call.1} parent=1 // pred_check_branch
      %130 = sbr.rel (0) target = $region25
    $region24: #{tpu_custom_call.1} parent=1 // pred_region
      %131 = dma.done [#allocation4], 256
    $region25: #{tpu_custom_call.1} parent=1 // pred_fallthru
      _
    %132 = vsyncpa [#allocation3], 1
    %133 = vsyncpa [#allocation6], 1
    %134 = vsyncpa [#allocation4], 1

</llo_original>
